<compile_context>
chip_gen: v5e
topology: v5e:2x2
jax: 0.10.0
libtpu: 0.0.40
codegen_flags: <defaults>
</compile_context>

<pallas_src>
import numpy as np
import jax
import jax.numpy as jnp
from jax import lax
from jax.experimental import pallas as pl
from jax.experimental.pallas import tpu as pltpu


# ---------------------------------------------------------------------------
# Host-side helpers
# ---------------------------------------------------------------------------
def _linear_interp_matrix(n_in, n_out):
    """(n_out, n_in) 1-D linear interpolation matrix, align_corners=True."""
    A = np.zeros((n_out, n_in), dtype=np.float32)
    if n_in == 1 or n_out == 1:
        A[:, 0] = 1.0
        return A
    src = np.arange(n_out, dtype=np.float64) * (n_in - 1) / (n_out - 1)
    i0 = np.clip(np.floor(src).astype(np.int64), 0, n_in - 2)
    frac = (src - i0).astype(np.float32)
    rows = np.arange(n_out)
    A[rows, i0] += 1.0 - frac
    A[rows, i0 + 1] += frac
    return A


def _vmem_capacity_bytes():
    """Physical VMEM per core; conservative fallback if the query fails."""
    try:
        return int(pltpu.get_tpu_info().vmem_capacity_bytes)
    except Exception:
        return 64 << 20  # v7x physical size; v5e/v6e have 128 MiB


def _legal_tile_cs(N, H, Ho):
    """Channel-tile sizes whose (tile_c*H, W)/(tile_c*Ho, Wo) blocks satisfy
    the (8, 128) second-to-last-dim rule (or cover the full array)."""
    return [d for d in range(1, N + 1)
            if N % d == 0
            and ((d * H) % 8 == 0 or d == N)
            and ((d * Ho) % 8 == 0 or d == N)]


def _pick_tile_c(N, H, Ho, per_chan_bytes, budget_bytes):
    """Largest channel tile under the VMEM budget, preferring >=4 grid steps,
    >=1 MiB per step, and an even step count (v7x megacore balance)."""
    fits = [d for d in _legal_tile_cs(N, H, Ho)
            if d * per_chan_bytes <= budget_bytes]
    if not fits:
        return None

    def key(d):
        n = N // d
        return (n >= 4,                            # enough steps to overlap DMA
                d * per_chan_bytes >= (1 << 20),   # amortize ~0.35us/step cost
                n % 2 == 0,                        # even split across 2 TCs
                d)                                 # then: biggest tile
    return max(fits, key=key)


# ---------------------------------------------------------------------------
# Channel-tiled kernel (main path)
# ---------------------------------------------------------------------------
def _make_channel_kernel(tile_c, H, W, Ho, Wo, width_first, compute_dtype):
    # Rolled loop only once the unrolled body would get large and the
    # per-channel slices stay sublane aligned for dynamic offsets.
    dynamic_loop = tile_c > 8 and H % 8 == 0 and Ho % 8 == 0

    def one_channel(ah, awt, x_ref, o_ref, x_start, o_start):
        xc = x_ref[pl.ds(x_start, H), :].astype(compute_dtype)
        if width_first:
            y = jnp.dot(xc, awt, preferred_element_type=jnp.float32)
            oc = jnp.dot(ah, y.astype(compute_dtype),
                         preferred_element_type=jnp.float32)
        else:
            y = jnp.dot(ah, xc, preferred_element_type=jnp.float32)
            oc = jnp.dot(y.astype(compute_dtype), awt,
                         preferred_element_type=jnp.float32)
        o_ref[pl.ds(o_start, Ho), :] = oc.astype(o_ref.dtype)

    def kernel(ah_ref, awt_ref, x_ref, o_ref):
        # ah_ref : (Ho, H)           resident height-interp matrix
        # awt_ref: (W, Wo)           resident width-interp matrix (pre-transposed)
        # x_ref  : (tile_c*H, W)     tile of input rows (flat over channels)
        # o_ref  : (tile_c*Ho, Wo)   tile of output rows (lane-dense minor dim)
        ah = ah_ref[...]
        awt = awt_ref[...]
        if dynamic_loop:
            def body(c, carry):
                one_channel(ah, awt, x_ref, o_ref,
                            pl.multiple_of(c * H, H),
                            pl.multiple_of(c * Ho, Ho))
                return carry
            lax.fori_loop(0, tile_c, body, 0)
        else:
            for c in range(tile_c):
                one_channel(ah, awt, x_ref, o_ref, c * H, c * Ho)

    return kernel


def _channel_tiled_call(xf, Ah, AwT, N, H, W, Ho, Wo, tile_c, out_dtype,
                        compute_dtype, width_first, cap):
    in_isz = np.dtype(xf.dtype).itemsize
    out_isz = np.dtype(out_dtype).itemsize
    w_isz = np.dtype(compute_dtype).itemsize

    n_tiles = N // tile_c
    per_chan_bytes = 2 * (H * W * in_isz + Ho * Wo * out_isz)  # dbl-buffered io
    weight_bytes = 2 * (Ho * H + W * Wo) * w_isz
    footprint = tile_c * per_chan_bytes + weight_bytes
    vmem_limit = int(min(cap, max(footprint + (8 << 20), 32 << 20)))

    if width_first:
        flops = 2 * N * (H * W * Wo + Ho * H * Wo)
    else:
        flops = 2 * N * (Ho * H * W + Ho * W * Wo)
    cost = pl.CostEstimate(
        flops=int(flops), transcendentals=0,
        bytes_accessed=int(N * (H * W * in_isz + Ho * Wo * out_isz)
                           + (Ho * H + W * Wo) * w_isz))

    return pl.pallas_call(
        _make_channel_kernel(tile_c, H, W, Ho, Wo, width_first, compute_dtype),
        out_shape=jax.ShapeDtypeStruct((N * Ho, Wo), out_dtype),
        grid_spec=pltpu.PrefetchScalarGridSpec(
            num_scalar_prefetch=0,
            grid=(n_tiles,),
            in_specs=[
                pl.BlockSpec((Ho, H), lambda i: (0, 0)),          # A_h (resident)
                pl.BlockSpec((W, Wo), lambda i: (0, 0)),          # A_w^T (resident)
                pl.BlockSpec((tile_c * H, W), lambda i: (i, 0)),  # input tile
            ],
            out_specs=pl.BlockSpec((tile_c * Ho, Wo), lambda i: (i, 0)),
        ),
        compiler_params=pltpu.CompilerParams(
            dimension_semantics=("parallel",),
            vmem_limit_bytes=vmem_limit),
        cost_estimate=cost,
    )(Ah, AwT, xf)


# ---------------------------------------------------------------------------
# Row-tiled fallback (2-D grid: channels x output-row blocks).  Used when even
# a single-channel tile exceeds the VMEM budget — primarily a v7x concern
# (64 MiB physical / 32 MiB default scoped VMEM).  Height-first order so the
# (tile_ho, W) intermediate never redoes width interpolation across row tiles.
# ---------------------------------------------------------------------------
def _row_tiled_call(xf, Ah, AwT, N, H, W, Ho, Wo, out_dtype, compute_dtype,
                    budget_bytes, cap):
    in_isz = np.dtype(xf.dtype).itemsize
    out_isz = np.dtype(out_dtype).itemsize
    w_isz = np.dtype(compute_dtype).itemsize

    fixed = 2 * H * W * in_isz + 2 * W * Wo * w_isz       # x block + A_w^T
    per_row = 2 * (H * w_isz + Wo * out_isz)              # A_h rows + out rows
    cands = [t for t in range(8, Ho + 1, 8) if Ho % t == 0] or [Ho]
    fits = [t for t in cands if fixed + t * per_row <= budget_bytes]
    tile_ho = max(fits) if fits else min(cands)
    n_row_tiles = Ho // tile_ho

    footprint = fixed + tile_ho * per_row
    vmem_limit = int(min(cap, max(footprint + (8 << 20), 32 << 20)))
    cost = pl.CostEstimate(
        flops=int(2 * N * (Ho * H * W + Ho * W * Wo)), transcendentals=0,
        bytes_accessed=int(N * (H * W * in_isz + Ho * Wo * out_isz)
                           + (Ho * H + W * Wo) * w_isz))

    def kernel(ah_ref, awt_ref, x_ref, o_ref):
        y = jnp.dot(ah_ref[...], x_ref[...].astype(compute_dtype),
                    preferred_element_type=jnp.float32)
        o_ref[...] = jnp.dot(y.astype(compute_dtype), awt_ref[...],
                             preferred_element_type=jnp.float32
                             ).astype(o_ref.dtype)

    return pl.pallas_call(
        kernel,
        out_shape=jax.ShapeDtypeStruct((N * Ho, Wo), out_dtype),
        grid_spec=pltpu.PrefetchScalarGridSpec(
            num_scalar_prefetch=0,
            grid=(N, n_row_tiles),
            in_specs=[
                pl.BlockSpec((tile_ho, H), lambda i, j: (j, 0)),  # A_h row block
                pl.BlockSpec((W, Wo), lambda i, j: (0, 0)),       # A_w^T resident
                pl.BlockSpec((H, W), lambda i, j: (i, 0)),        # one channel
            ],
            out_specs=pl.BlockSpec((tile_ho, Wo),
                                   lambda i, j: (i * n_row_tiles + j, 0)),
        ),
        compiler_params=pltpu.CompilerParams(
            dimension_semantics=("parallel", "parallel"),
            vmem_limit_bytes=vmem_limit),
        cost_estimate=cost,
    )(Ah, AwT, xf)


# ---------------------------------------------------------------------------
# Public wrapper
# ---------------------------------------------------------------------------
def csph2d_local_decoding_forward(x, factor, *, compute_dtype=jnp.float32,
                                  out_dtype=None, budget_bytes=None):
    """x: (B, C, H, W); returns (B, C, H*factor, W*factor).

    compute_dtype=jnp.bfloat16 enables the fast MXU path on v6e/v7x (with f32
    accumulation); out_dtype=jnp.bfloat16 halves the dominant write traffic if
    the consumer tolerates it.  Defaults keep full f32 module semantics."""
    B, C, H, W = x.shape
    Ho, Wo = H * factor, W * factor
    N = B * C
    out_dtype = x.dtype if out_dtype is None else out_dtype

    in_isz = np.dtype(x.dtype).itemsize
    out_isz = np.dtype(out_dtype).itemsize

    # Tiny interpolation matrices, resident in VMEM at the compute dtype.
    Ah = jnp.asarray(_linear_interp_matrix(H, Ho)).astype(compute_dtype)   # (Ho, H)
    AwT = jnp.asarray(_linear_interp_matrix(W, Wo)).T.astype(compute_dtype)  # (W, Wo)

    # Zero-copy row-major view of the NCHW input.
    xf = x.reshape(N * H, W)

    cap = _vmem_capacity_bytes()
    if budget_bytes is None:
        budget_bytes = min(cap // 2, 48 << 20)

    # Interpolation order by aspect ratio (minimizes MACs; equal when H == W).
    width_first = W >= H

    # Per-step footprint of one channel: double-buffered input + output blocks
    # (no scratch after the matmul fusion).
    per_chan_bytes = 2 * (H * W * in_isz + Ho * Wo * out_isz)
    tile_c = _pick_tile_c(N, H, Ho, per_chan_bytes, budget_bytes)

    if tile_c is not None:
        out_flat = _channel_tiled_call(xf, Ah, AwT, N, H, W, Ho, Wo, tile_c,
                                       out_dtype, compute_dtype, width_first,
                                       cap)
    elif H % 8 == 0:
        out_flat = _row_tiled_call(xf, Ah, AwT, N, H, W, Ho, Wo, out_dtype,
                                   compute_dtype, budget_bytes, cap)
    else:
        # Last resort: smallest legal channel tile with the scoped-VMEM limit
        # raised toward the physical capacity.
        tile_c = min(_legal_tile_cs(N, H, Ho))
        out_flat = _channel_tiled_call(xf, Ah, AwT, N, H, W, Ho, Wo, tile_c,
                                       out_dtype, compute_dtype, width_first,
                                       cap)

    return out_flat.reshape(B, C, Ho, Wo)


def reference_forward(x, factor):
    """Pure-JAX reference of UpsamplingBilinear2d (align_corners=True)."""
    B, C, H, W = x.shape
    Ah = jnp.asarray(_linear_interp_matrix(H, H * factor))   # (Ho, H)
    Aw = jnp.asarray(_linear_interp_matrix(W, W * factor))   # (Wo, W)
    y = jnp.einsum('oh,bchw->bcow', Ah, x)
    return jnp.einsum('bcow,qw->bcoq', y, Aw)


if __name__ == "__main__":
    # Small NCHW config: batch=2, channels=4, 64x64 spatial, 2x upsample
    # (output minor dim 128 -> lane-dense stores).
    B, C, H, W, factor = 2, 4, 64, 64, 2

    key = jax.random.PRNGKey(0)
    x = jax.random.uniform(key, (B, C, H, W), dtype=jnp.float32)

    ref = jax.block_until_ready(reference_forward(x, factor))

    # Main (channel-tiled) path.
    out = jax.block_until_ready(csph2d_local_decoding_forward(x, factor))
    np.testing.assert_allclose(np.asarray(out), np.asarray(ref),
                               rtol=1e-5, atol=1e-5)
    # align_corners=True invariant: corner pixels are preserved exactly.
    np.testing.assert_allclose(np.asarray(out[..., 0, 0]),
                               np.asarray(x[..., 0, 0]), rtol=1e-5, atol=1e-6)
    np.testing.assert_allclose(np.asarray(out[..., -1, -1]),
                               np.asarray(x[..., -1, -1]), rtol=1e-5, atol=1e-6)
    assert out.shape == (B, C, H * factor, W * factor)

    # Exercise the row-tiled fallback path (forced via a tiny VMEM budget) so
    # the v7x large-shape branch is correctness-checked too.
    out_fb = jax.block_until_ready(
        csph2d_local_decoding_forward(x, factor, budget_bytes=64 * 1024))
    np.testing.assert_allclose(np.asarray(out_fb), np.asarray(ref),
                               rtol=1e-5, atol=1e-5)

    print("KERNEL_OK")
</pallas_src>

<mosaic_0001>
module attributes {stable_mosaic.version = 11 : i64} {
  func.func @kernel(%arg0: i32, %arg1: memref<128x64xf32, #tpu.memory_space<vmem>>, %arg2: memref<64x128xf32, #tpu.memory_space<vmem>>, %arg3: memref<128x64xf32, #tpu.memory_space<vmem>>, %arg4: memref<256x128xf32, #tpu.memory_space<vmem>>) attributes {dimension_semantics = [#tpu.dimension_semantics<parallel>], iteration_bounds = array<i64: 4>, scalar_prefetch = 0 : i64, scratch_operands = 0 : i64, tpu.core_type = #tpu.core_type<tc>, window_params = [{pipeline_mode = #tpu.pipeline_mode<synchronous>, transform_indices = @transform_0, window_bounds = array<i64: 128, 64>}, {pipeline_mode = #tpu.pipeline_mode<synchronous>, transform_indices = @transform_1, window_bounds = array<i64: 64, 128>}, {transform_indices = @transform_2, window_bounds = array<i64: 128, 64>}, {transform_indices = @transform_3, window_bounds = array<i64: 256, 128>}]} {
    %c0 = arith.constant 0 : index
    %c0_0 = arith.constant 0 : index
    %0 = vector.load %arg1[%c0, %c0_0] : memref<128x64xf32, #tpu.memory_space<vmem>>, vector<128x64xf32>
    %c0_1 = arith.constant 0 : index
    %c0_2 = arith.constant 0 : index
    %1 = vector.load %arg2[%c0_1, %c0_2] : memref<64x128xf32, #tpu.memory_space<vmem>>, vector<64x128xf32>
    %c0_3 = arith.constant 0 : index
    %c0_4 = arith.constant 0 : index
    %2 = vector.load %arg3[%c0_3, %c0_4] : memref<128x64xf32, #tpu.memory_space<vmem>>, vector<64x64xf32>
    %cst = arith.constant dense<0.000000e+00> : vector<64x128xf32>
    %3 = tpu.matmul %2, %1, %cst {dimension_numbers = #tpu.dot_dimension_numbers<[1], [0], [0], [1], [0, 0, 1, 1], [], []>} : vector<64x64xf32>, vector<64x128xf32>, vector<64x128xf32> -> vector<64x128xf32>
    %cst_5 = arith.constant dense<0.000000e+00> : vector<128x128xf32>
    %4 = tpu.matmul %0, %3, %cst_5 {dimension_numbers = #tpu.dot_dimension_numbers<[1], [0], [0], [1], [0, 0, 1, 1], [], []>} : vector<128x64xf32>, vector<64x128xf32>, vector<128x128xf32> -> vector<128x128xf32>
    %c0_6 = arith.constant 0 : index
    %c0_7 = arith.constant 0 : index
    %5 = vector.load %arg4[%c0_6, %c0_7] : memref<256x128xf32, #tpu.memory_space<vmem>>, vector<128x128xf32>
    tpu.vector_store %arg4[%c0_6, %c0_7], %4 {strides = array<i32>} : memref<256x128xf32, #tpu.memory_space<vmem>>, vector<128x128xf32>,
    %c64 = arith.constant 64 : index
    %c0_8 = arith.constant 0 : index
    %6 = vector.load %arg3[%c64, %c0_8] : memref<128x64xf32, #tpu.memory_space<vmem>>, vector<64x64xf32>
    %cst_9 = arith.constant dense<0.000000e+00> : vector<64x128xf32>
    %7 = tpu.matmul %6, %1, %cst_9 {dimension_numbers = #tpu.dot_dimension_numbers<[1], [0], [0], [1], [0, 0, 1, 1], [], []>} : vector<64x64xf32>, vector<64x128xf32>, vector<64x128xf32> -> vector<64x128xf32>
    %cst_10 = arith.constant dense<0.000000e+00> : vector<128x128xf32>
    %8 = tpu.matmul %0, %7, %cst_10 {dimension_numbers = #tpu.dot_dimension_numbers<[1], [0], [0], [1], [0, 0, 1, 1], [], []>} : vector<128x64xf32>, vector<64x128xf32>, vector<128x128xf32> -> vector<128x128xf32>
    %c128 = arith.constant 128 : index
    %c0_11 = arith.constant 0 : index
    %9 = vector.load %arg4[%c128, %c0_11] : memref<256x128xf32, #tpu.memory_space<vmem>>, vector<128x128xf32>
    tpu.vector_store %arg4[%c128, %c0_11], %8 {strides = array<i32>} : memref<256x128xf32, #tpu.memory_space<vmem>>, vector<128x128xf32>,
    return
  }
  func.func @transform_0(%arg0: i32) -> (i32, i32) {
    %c0_i32 = arith.constant 0 : i32
    %c0_i32_0 = arith.constant 0 : i32
    %c0_i32_1 = arith.constant 0 : i32
    return %c0_i32, %c0_i32_0 : i32, i32
  }
  func.func @transform_1(%arg0: i32) -> (i32, i32) {
    %c0_i32 = arith.constant 0 : i32
    %c0_i32_0 = arith.constant 0 : i32
    %c0_i32_1 = arith.constant 0 : i32
    return %c0_i32, %c0_i32_0 : i32, i32
  }
  func.func @transform_2(%arg0: i32) -> (i32, i32) {
    %c0_i32 = arith.constant 0 : i32
    %c0_i32_0 = arith.constant 0 : i32
    return %arg0, %c0_i32 : i32, i32
  }
  func.func @transform_3(%arg0: i32) -> (i32, i32) {
    %c0_i32 = arith.constant 0 : i32
    %c0_i32_0 = arith.constant 0 : i32
    return %arg0, %c0_i32 : i32, i32
  }
}

</mosaic_0001>

<llo_original>
// kernel: tpu_custom_call.1
$region0: #{tpu_custom_call.1}
  #allocation0 [shape = 'u32[]', space=smem, size = 0x4, offset = 0x4, fixed_abs, tag = 'smem constant byte address 0x4 - core index']
  #allocation1 [shape = 'u32[72,128]{1,0:T(1,128)}', space=vmem, size = 0x9000, scoped, tag = 'internal scratch']
  %s0 = inlined_call_operand.vmem [shape: f32[128,64], index: 0, kind: input, shape index: {}]
  %s1 = inlined_call_operand.vmem [shape: f32[64,128], index: 1, kind: input, shape index: {}]
  %s2 = inlined_call_operand.vmem [shape: f32[512,64], index: 2, kind: input, shape index: {}]
  %s3 = inlined_call_operand.hbm [shape: f32[1024,128], index: 3, kind: output, shape index: {}]
  %s4 = sld [smem:[#allocation0]]
  $region45: #{tpu_custom_call.1} parent=0
    _
  %s6 = ssub.s32 1, %s4
  %s7 = scalar_select 0, %s6, %s4
  $region1: #{tpu_custom_call.1} parent=0
    #allocation2 [shape = 'u8[262144]{0}', space=vmem, size = 0x40000, scoped, tag = 'output window, operand 0']
    #allocation3 [shape = 's32[2]{0}', space=sflag, size = 0x8, scoped, tag = 'scoped memory for tpu_custom_call.1']
    %8 = vsyncpa [#allocation3], 0
    %s9 = scalar_lea.sflag [#allocation3], 1
    %10 = vsyncpa %s9, 0
    loop: start=0, step=1, limit=6
    $region2: #{tpu_custom_call.1} parent=1 // loop_pre_header
      _
    $region3: #{tpu_custom_call.1} parent=1 // loop_header
      %s12 = sphi 0, %s16
      %p13 = scmp.ge.s32.totalorder %s12, 6
      %s20 = sphi 0, %s20
      %s22 = sphi 0, %s20
      %s23 = sphi 0, %s22
      %s37 = sphi 0, %s23
      %s41 = sphi 0, %s41
      %s43 = sphi 0, %s41
      %s44 = sphi 0, %s43
      %s58 = sphi 0, %s44
      %s64 = sphi 0, %s66
      %s67 = sphi 0, %s64
      %s68 = sphi 0, %s67
      %s84 = sphi 0, %s68
      %s90 = sphi 0, %s92
      %s93 = sphi 0, %s90
      %s94 = sphi 0, %s93
      %s110 = sphi 0, %s94
    $region4: #{tpu_custom_call.1} parent=1 // loop_header_branch
      %15 = sbr.rel (%p13) target = $region8
    $region5: #{tpu_custom_call.1} parent=1 // loop_body
      %s17 = ssub.s32 %s12, 1
      %s18 = ssub.s32 %s12, 2
      %s19 = sadd.s32 %s12, 1
      %s21 = sadd.s32 %s20, 1
      %p24 = scmp.eq.s32.totalorder %s12, 3
      %p25 = scmp.ne.s32.totalorder %s20, %s22
      %p26 = scmp.eq.s32.totalorder %s12, 0
      %p27 = por %p25, %p26
      %p28 = scmp.ne.s32.totalorder %s20, %s22
      %p29 = scmp.eq.s32.totalorder %s17, 3
      %p30 = por %p28, %p29
      %p31 = scmp.ne.s32.totalorder %s22, %s23
      %p32 = scmp.eq.s32.totalorder %s17, 0
      %p33 = por %p31, %p32
      %p34 = scmp.ne.s32.totalorder %s22, %s23
      %p35 = scmp.eq.s32.totalorder %s18, 3
      %p36 = por %p34, %p35
      %p38 = scmp.ne.s32.totalorder %s23, %s37
      %p39 = scmp.eq.s32.totalorder %s18, 0
      %p40 = por %p38, %p39
      %s42 = sadd.s32 %s41, 1
      %p45 = scmp.eq.s32.totalorder %s12, 3
      %p46 = scmp.ne.s32.totalorder %s41, %s43
      %p47 = scmp.eq.s32.totalorder %s12, 0
      %p48 = por %p46, %p47
      %p49 = scmp.ne.s32.totalorder %s41, %s43
      %p50 = scmp.eq.s32.totalorder %s17, 3
      %p51 = por %p49, %p50
      %p52 = scmp.ne.s32.totalorder %s43, %s44
      %p53 = scmp.eq.s32.totalorder %s17, 0
      %p54 = por %p52, %p53
      %p55 = scmp.ne.s32.totalorder %s43, %s44
      %p56 = scmp.eq.s32.totalorder %s18, 3
      %p57 = por %p55, %p56
      %p59 = scmp.ne.s32.totalorder %s44, %s58
      %p60 = scmp.eq.s32.totalorder %s18, 0
      %p61 = por %p59, %p60
      %s62 = ssub.s32 %s12, %s19
      %p63 = scmp.eq.s32.totalorder %s62, 0
      %s65 = sadd.s32 %s64, 1
      %s66 = scalar_select %p63, %s64, %s65
      %p69 = pneg %p63
      %p70 = scmp.eq.s32.totalorder %s12, 3
      %p71 = por %p69, %p70
      %p72 = scmp.ne.s32.totalorder %s64, %s67
      %p73 = scmp.eq.s32.totalorder %s12, 0
      %p74 = por %p72, %p73
      %p75 = scmp.ne.s32.totalorder %s64, %s67
      %p76 = scmp.eq.s32.totalorder %s17, 3
      %p77 = por %p75, %p76
      %p78 = scmp.ne.s32.totalorder %s67, %s68
      %p79 = scmp.eq.s32.totalorder %s17, 0
      %p80 = por %p78, %p79
      %p81 = scmp.ne.s32.totalorder %s67, %s68
      %p82 = scmp.eq.s32.totalorder %s18, 3
      %p83 = por %p81, %p82
      %p85 = scmp.ne.s32.totalorder %s68, %s84
      %p86 = scmp.eq.s32.totalorder %s18, 0
      %p87 = por %p85, %p86
      %s88 = ssub.s32 %s12, %s19
      %p89 = scmp.eq.s32.totalorder %s88, 0
      %s91 = sadd.s32 %s90, 1
      %s92 = scalar_select %p89, %s90, %s91
      %p95 = pneg %p89
      %p96 = scmp.eq.s32.totalorder %s12, 3
      %p97 = por %p95, %p96
      %p98 = scmp.ne.s32.totalorder %s90, %s93
      %p99 = scmp.eq.s32.totalorder %s12, 0
      %p100 = por %p98, %p99
      %p101 = scmp.ne.s32.totalorder %s90, %s93
      %p102 = scmp.eq.s32.totalorder %s17, 3
      %p103 = por %p101, %p102
      %p104 = scmp.ne.s32.totalorder %s93, %s94
      %p105 = scmp.eq.s32.totalorder %s17, 0
      %p106 = por %p104, %p105
      %p107 = scmp.ne.s32.totalorder %s93, %s94
      %p108 = scmp.eq.s32.totalorder %s18, 3
      %p109 = por %p107, %p108
      %p111 = scmp.ne.s32.totalorder %s94, %s110
      %p112 = scmp.eq.s32.totalorder %s18, 0
      %p113 = por %p111, %p112
      %p114 = scmp.le.s32.totalorder 1, %s12
      %p115 = scmp.lt.s32.totalorder %s12, 5
      %p116 = pnand %p114, %p115
      %p117 = pneg %p116
      // Predicated region
      $region9: #{tpu_custom_call.1} parent=5 // pred_check
        _
      $region10: #{tpu_custom_call.1} parent=5 // pred_check_branch
        %119 = sbr.rel (%p116) target = $region12
      $region11: #{tpu_custom_call.1} parent=5 // pred_region
        %s120 = ssub.s32 %s12, 1
        // Predicated region
        $region13: #{tpu_custom_call.1} parent=11 // pred_check
          %p121 = pneg %p33
        $region14: #{tpu_custom_call.1} parent=11 // pred_check_branch
          %123 = sbr.rel (%p121) target = $region16
        $region15: #{tpu_custom_call.1} parent=11 // pred_region
          _
        $region16: #{tpu_custom_call.1} parent=11 // pred_fallthru
          _
        // Predicated region
        $region17: #{tpu_custom_call.1} parent=11 // pred_check
          %p124 = pneg %p54
        $region18: #{tpu_custom_call.1} parent=11 // pred_check_branch
          %126 = sbr.rel (%p124) target = $region20
        $region19: #{tpu_custom_call.1} parent=11 // pred_region
          _
        $region20: #{tpu_custom_call.1} parent=11 // pred_fallthru
          _
      $region12: #{tpu_custom_call.1} parent=5 // pred_fallthru
        _
      %p127 = scmp.lt.s32.totalorder %s12, 4
      // Predicated region
      $region21: #{tpu_custom_call.1} parent=5 // pred_check
        %p128 = pneg %p127
      $region22: #{tpu_custom_call.1} parent=5 // pred_check_branch
        %130 = sbr.rel (%p128) target = $region24
      $region23: #{tpu_custom_call.1} parent=5 // pred_region
        // Predicated region
        $region25: #{tpu_custom_call.1} parent=23 // pred_check
          %p131 = pneg %p74
        $region26: #{tpu_custom_call.1} parent=23 // pred_check_branch
          %133 = sbr.rel (%p131) target = $region28
        $region27: #{tpu_custom_call.1} parent=23 // pred_region
          %s134 = smul.u32 16, %s12
          %p135 = scmp.lt.s32.totalorder %s134, 63
          %s136 = scalar_select %p135, %s134, 63
          %s137 = smul.addr %s136, 8
          %s138 = scalar_lea.vmem %s2, %s137
          %s139 = smul.u32 16, %s12
        $region28: #{tpu_custom_call.1} parent=23 // pred_fallthru
          _
      $region24: #{tpu_custom_call.1} parent=5 // pred_fallthru
        _
      %p140 = scmp.le.s32.totalorder 1, %s12
      %p141 = scmp.lt.s32.totalorder %s12, 5
      %p142 = pnand %p140, %p141
      %p143 = pneg %p142
      // Predicated region
      $region29: #{tpu_custom_call.1} parent=5 // pred_check
        _
      $region30: #{tpu_custom_call.1} parent=5 // pred_check_branch
        %145 = sbr.rel (%p142) target = $region32
      $region31: #{tpu_custom_call.1} parent=5 // pred_region
        %s146 = ssub.s32 %s12, 1
        %p147 = pneg %p33
        %p148 = pneg %p30
        %p149 = pneg %p54
        %p150 = pneg %p51
        %s151 = smul.u32 16, %s17
        %p152 = scmp.lt.s32.totalorder %s151, 63
        %s153 = scalar_select %p152, %s151, 63
        %s154 = smul.addr %s153, 8
        %s155 = scalar_lea.vmem %s2, %s154
        %p156 = pneg %p80
        %p157 = pneg %p77
        %p158 = pneg %p106
        %p159 = pneg %p103
        %s160 = sand.u32 %s93, 1
        %s161 = scalar_lea.sflag [#allocation3], %s160
        %s162 = sand.u32 %s93, 1
        %s163 = smul.addr %s162, 256
        %s164 = scalar_lea.vmem [#allocation2], %s163
        %s165 = smul.u32 16, %s17
        %p166 = scmp.lt.s32.totalorder %s165, 63
        %s167 = scalar_select %p166, %s165, 63
        %s168 = smul.addr %s167, 8
        %s169 = scalar_lea.vmem %s2, %s168
        %s170 = smul.u32 16, %s17
        %s171 = smul.u32 32, %s17
        %v172 = vld [vmem:[%s0] sm:$0xff]
        %v173 = vld [vmem:[%s0 + $0x8] sm:$0xff]
        %v174 = vld [vmem:[%s0 + $0x10] sm:$0xff]
        %v175 = vld [vmem:[%s0 + $0x18] sm:$0xff]
        %v176 = vld [vmem:[%s0 + $0x20] sm:$0xff]
        %v177 = vld [vmem:[%s0 + $0x28] sm:$0xff]
        %v178 = vld [vmem:[%s0 + $0x30] sm:$0xff]
        %v179 = vld [vmem:[%s0 + $0x38] sm:$0xff]
        %v180 = vld [vmem:[%s0 + $0x40] sm:$0xff]
        %v181 = vld [vmem:[%s0 + $0x48] sm:$0xff]
        %v182 = vld [vmem:[%s0 + $0x50] sm:$0xff]
        %v183 = vld [vmem:[%s0 + $0x58] sm:$0xff]
        %v184 = vld [vmem:[%s0 + $0x60] sm:$0xff]
        %v185 = vld [vmem:[%s0 + $0x68] sm:$0xff]
        %v186 = vld [vmem:[%s0 + $0x70] sm:$0xff]
        %v187 = vld [vmem:[%s0 + $0x78] sm:$0xff]
        %v188 = vld [vmem:[%s1] sm:$0xff]
        %v189 = vld [vmem:[%s1 + $0x8] sm:$0xff]
        %v190 = vld [vmem:[%s1 + $0x10] sm:$0xff]
        %v191 = vld [vmem:[%s1 + $0x18] sm:$0xff]
        %v192 = vld [vmem:[%s1 + $0x20] sm:$0xff]
        %v193 = vld [vmem:[%s1 + $0x28] sm:$0xff]
        %v194 = vld [vmem:[%s1 + $0x30] sm:$0xff]
        %v195 = vld [vmem:[%s1 + $0x38] sm:$0xff]
        %v196 = vld [vmem:[%s169] sm:$0xff]
        %v197 = vld [vmem:[%s169 + $0x8] sm:$0xff]
        %v198 = vld [vmem:[%s169 + $0x10] sm:$0xff]
        %v199 = vld [vmem:[%s169 + $0x18] sm:$0xff]
        %v200 = vld [vmem:[%s169 + $0x20] sm:$0xff]
        %v201 = vld [vmem:[%s169 + $0x28] sm:$0xff]
        %v202 = vld [vmem:[%s169 + $0x30] sm:$0xff]
        %v203 = vld [vmem:[%s169 + $0x38] sm:$0xff]
        %vm204 = vcmask 523264
        %v206 = vsel %vm204, %v196, 0
        %v209 = vsel %vm204, %v197, 0
        %v212 = vsel %vm204, %v198, 0
        %v215 = vsel %vm204, %v199, 0
        %v218 = vsel %vm204, %v200, 0
        %v221 = vsel %vm204, %v201, 0
        %v224 = vsel %vm204, %v202, 0
        %v227 = vsel %vm204, %v203, 0
        %229 = vmatpush.msra.mxu0 0.0
        %230 = vmatpush.msra.mxu0 0.0
        %231 = vmatpush.msra.mxu0 0.0
        %232 = vmatpush.msra.mxu0 0.0
        %233 = vmatpush.msra.mxu0 0.0
        %234 = vmatpush.msra.mxu0 0.0
        %235 = vmatpush.msra.mxu0 0.0
        %236 = vmatpush.msra.mxu0 0.0
        %237 = vmatpush.msra.mxu0 %v195
        %238 = vmatpush.msra.mxu0 %v194
        %239 = vmatpush.msra.mxu0 %v193
        %240 = vmatpush.msra.mxu0 %v192
        %241 = vmatpush.msra.mxu0 %v191
        %242 = vmatpush.msra.mxu0 %v190
        %243 = vmatpush.msra.mxu0 %v189
        %244 = vmatpush.msra.mxu0 %v188
        %245 = vmatmul.f32.gmra.mxu0 %v206
        %v246 = vpop.f32.mrf.mxu0
        %v247 = vadd.f32 0.0, %v246
        %248 = vmatmul.f32.gmra.mxu0 %v209
        %v249 = vpop.f32.mrf.mxu0
        %v250 = vadd.f32 0.0, %v249
        %251 = vmatmul.f32.gmra.mxu0 %v212
        %v252 = vpop.f32.mrf.mxu0
        %v253 = vadd.f32 0.0, %v252
        %254 = vmatmul.f32.gmra.mxu0 %v215
        %v255 = vpop.f32.mrf.mxu0
        %v256 = vadd.f32 0.0, %v255
        %257 = vmatmul.f32.gmra.mxu0 %v218
        %v258 = vpop.f32.mrf.mxu0
        %v259 = vadd.f32 0.0, %v258
        %260 = vmatmul.f32.gmra.mxu0 %v221
        %v261 = vpop.f32.mrf.mxu0
        %v262 = vadd.f32 0.0, %v261
        %263 = vmatmul.f32.gmra.mxu0 %v224
        %v264 = vpop.f32.mrf.mxu0
        %v265 = vadd.f32 0.0, %v264
        %266 = vmatmul.f32.gmra.mxu0 %v227
        %v267 = vpop.f32.mrf.mxu0
        %v268 = vadd.f32 0.0, %v267
        %269 = vdwg.mxu0
        %v271 = vsel %vm204, %v172, 0
        %v274 = vsel %vm204, %v173, 0
        %v277 = vsel %vm204, %v174, 0
        %v280 = vsel %vm204, %v175, 0
        %v283 = vsel %vm204, %v176, 0
        %v286 = vsel %vm204, %v177, 0
        %v289 = vsel %vm204, %v178, 0
        %v292 = vsel %vm204, %v179, 0
        %v295 = vsel %vm204, %v180, 0
        %v298 = vsel %vm204, %v181, 0
        %v301 = vsel %vm204, %v182, 0
        %v304 = vsel %vm204, %v183, 0
        %v307 = vsel %vm204, %v184, 0
        %v310 = vsel %vm204, %v185, 0
        %v313 = vsel %vm204, %v186, 0
        %v316 = vsel %vm204, %v187, 0
        %318 = vmatpush.msra.mxu0 0.0
        %319 = vmatpush.msra.mxu0 0.0
        %320 = vmatpush.msra.mxu0 0.0
        %321 = vmatpush.msra.mxu0 0.0
        %322 = vmatpush.msra.mxu0 0.0
        %323 = vmatpush.msra.mxu0 0.0
        %324 = vmatpush.msra.mxu0 0.0
        %325 = vmatpush.msra.mxu0 0.0
        %326 = vmatpush.msra.mxu0 %v268
        %327 = vmatpush.msra.mxu0 %v265
        %328 = vmatpush.msra.mxu0 %v262
        %329 = vmatpush.msra.mxu0 %v259
        %330 = vmatpush.msra.mxu0 %v256
        %331 = vmatpush.msra.mxu0 %v253
        %332 = vmatpush.msra.mxu0 %v250
        %333 = vmatpush.msra.mxu0 %v247
        %334 = vmatmul.f32.gmra.mxu0 %v271
        %v335 = vpop.f32.mrf.mxu0
        %v336 = vadd.f32 0.0, %v335
        %337 = vmatmul.f32.gmra.mxu0 %v274
        %v338 = vpop.f32.mrf.mxu0
        %v339 = vadd.f32 0.0, %v338
        %340 = vmatmul.f32.gmra.mxu0 %v277
        %v341 = vpop.f32.mrf.mxu0
        %v342 = vadd.f32 0.0, %v341
        %343 = vmatmul.f32.gmra.mxu0 %v280
        %v344 = vpop.f32.mrf.mxu0
        %v345 = vadd.f32 0.0, %v344
        %346 = vmatmul.f32.gmra.mxu0 %v283
        %v347 = vpop.f32.mrf.mxu0
        %v348 = vadd.f32 0.0, %v347
        %349 = vmatmul.f32.gmra.mxu0 %v286
        %v350 = vpop.f32.mrf.mxu0
        %v351 = vadd.f32 0.0, %v350
        %352 = vmatmul.f32.gmra.mxu0 %v289
        %v353 = vpop.f32.mrf.mxu0
        %v354 = vadd.f32 0.0, %v353
        %355 = vmatmul.f32.gmra.mxu0 %v292
        %v356 = vpop.f32.mrf.mxu0
        %v357 = vadd.f32 0.0, %v356
        %358 = vmatmul.f32.gmra.mxu0 %v295
        %v359 = vpop.f32.mrf.mxu0
        %v360 = vadd.f32 0.0, %v359
        %361 = vmatmul.f32.gmra.mxu0 %v298
        %v362 = vpop.f32.mrf.mxu0
        %v363 = vadd.f32 0.0, %v362
        %364 = vmatmul.f32.gmra.mxu0 %v301
        %v365 = vpop.f32.mrf.mxu0
        %v366 = vadd.f32 0.0, %v365
        %367 = vmatmul.f32.gmra.mxu0 %v304
        %v368 = vpop.f32.mrf.mxu0
        %v369 = vadd.f32 0.0, %v368
        %370 = vmatmul.f32.gmra.mxu0 %v307
        %v371 = vpop.f32.mrf.mxu0
        %v372 = vadd.f32 0.0, %v371
        %373 = vmatmul.f32.gmra.mxu0 %v310
        %v374 = vpop.f32.mrf.mxu0
        %v375 = vadd.f32 0.0, %v374
        %376 = vmatmul.f32.gmra.mxu0 %v313
        %v377 = vpop.f32.mrf.mxu0
        %v378 = vadd.f32 0.0, %v377
        %379 = vmatmul.f32.gmra.mxu0 %v316
        %v380 = vpop.f32.mrf.mxu0
        %v381 = vadd.f32 0.0, %v380
        %382 = vdwg.mxu0
        %383 = vst [vmem:[%s164] sm:$0xff] %v336
        %384 = vst [vmem:[%s164 + $0x8] sm:$0xff] %v339
        %385 = vst [vmem:[%s164 + $0x10] sm:$0xff] %v342
        %386 = vst [vmem:[%s164 + $0x18] sm:$0xff] %v345
        %387 = vst [vmem:[%s164 + $0x20] sm:$0xff] %v348
        %388 = vst [vmem:[%s164 + $0x28] sm:$0xff] %v351
        %389 = vst [vmem:[%s164 + $0x30] sm:$0xff] %v354
        %390 = vst [vmem:[%s164 + $0x38] sm:$0xff] %v357
        %391 = vst [vmem:[%s164 + $0x40] sm:$0xff] %v360
        %392 = vst [vmem:[%s164 + $0x48] sm:$0xff] %v363
        %393 = vst [vmem:[%s164 + $0x50] sm:$0xff] %v366
        %394 = vst [vmem:[%s164 + $0x58] sm:$0xff] %v369
        %395 = vst [vmem:[%s164 + $0x60] sm:$0xff] %v372
        %396 = vst [vmem:[%s164 + $0x68] sm:$0xff] %v375
        %397 = vst [vmem:[%s164 + $0x70] sm:$0xff] %v378
        %398 = vst [vmem:[%s164 + $0x78] sm:$0xff] %v381
        %v399 = vld [vmem:[%s169 + $0x40] sm:$0xff]
        %v400 = vld [vmem:[%s169 + $0x48] sm:$0xff]
        %v401 = vld [vmem:[%s169 + $0x50] sm:$0xff]
        %v402 = vld [vmem:[%s169 + $0x58] sm:$0xff]
        %v403 = vld [vmem:[%s169 + $0x60] sm:$0xff]
        %v404 = vld [vmem:[%s169 + $0x68] sm:$0xff]
        %v405 = vld [vmem:[%s169 + $0x70] sm:$0xff]
        %v406 = vld [vmem:[%s169 + $0x78] sm:$0xff]
        %v408 = vsel %vm204, %v399, 0
        %v411 = vsel %vm204, %v400, 0
        %v414 = vsel %vm204, %v401, 0
        %v417 = vsel %vm204, %v402, 0
        %v420 = vsel %vm204, %v403, 0
        %v423 = vsel %vm204, %v404, 0
        %v426 = vsel %vm204, %v405, 0
        %v429 = vsel %vm204, %v406, 0
        %431 = vmatpush.msra.mxu0 0.0
        %432 = vmatpush.msra.mxu0 0.0
        %433 = vmatpush.msra.mxu0 0.0
        %434 = vmatpush.msra.mxu0 0.0
        %435 = vmatpush.msra.mxu0 0.0
        %436 = vmatpush.msra.mxu0 0.0
        %437 = vmatpush.msra.mxu0 0.0
        %438 = vmatpush.msra.mxu0 0.0
        %439 = vmatpush.msra.mxu0 %v195
        %440 = vmatpush.msra.mxu0 %v194
        %441 = vmatpush.msra.mxu0 %v193
        %442 = vmatpush.msra.mxu0 %v192
        %443 = vmatpush.msra.mxu0 %v191
        %444 = vmatpush.msra.mxu0 %v190
        %445 = vmatpush.msra.mxu0 %v189
        %446 = vmatpush.msra.mxu0 %v188
        %447 = vmatmul.f32.gmra.mxu0 %v408
        %v448 = vpop.f32.mrf.mxu0
        %v449 = vadd.f32 0.0, %v448
        %450 = vmatmul.f32.gmra.mxu0 %v411
        %v451 = vpop.f32.mrf.mxu0
        %v452 = vadd.f32 0.0, %v451
        %453 = vmatmul.f32.gmra.mxu0 %v414
        %v454 = vpop.f32.mrf.mxu0
        %v455 = vadd.f32 0.0, %v454
        %456 = vmatmul.f32.gmra.mxu0 %v417
        %v457 = vpop.f32.mrf.mxu0
        %v458 = vadd.f32 0.0, %v457
        %459 = vmatmul.f32.gmra.mxu0 %v420
        %v460 = vpop.f32.mrf.mxu0
        %v461 = vadd.f32 0.0, %v460
        %462 = vmatmul.f32.gmra.mxu0 %v423
        %v463 = vpop.f32.mrf.mxu0
        %v464 = vadd.f32 0.0, %v463
        %465 = vmatmul.f32.gmra.mxu0 %v426
        %v466 = vpop.f32.mrf.mxu0
        %v467 = vadd.f32 0.0, %v466
        %468 = vmatmul.f32.gmra.mxu0 %v429
        %v469 = vpop.f32.mrf.mxu0
        %v470 = vadd.f32 0.0, %v469
        %471 = vdwg.mxu0
        %472 = vmatpush.msra.mxu0 0.0
        %473 = vmatpush.msra.mxu0 0.0
        %474 = vmatpush.msra.mxu0 0.0
        %475 = vmatpush.msra.mxu0 0.0
        %476 = vmatpush.msra.mxu0 0.0
        %477 = vmatpush.msra.mxu0 0.0
        %478 = vmatpush.msra.mxu0 0.0
        %479 = vmatpush.msra.mxu0 0.0
        %480 = vmatpush.msra.mxu0 %v470
        %481 = vmatpush.msra.mxu0 %v467
        %482 = vmatpush.msra.mxu0 %v464
        %483 = vmatpush.msra.mxu0 %v461
        %484 = vmatpush.msra.mxu0 %v458
        %485 = vmatpush.msra.mxu0 %v455
        %486 = vmatpush.msra.mxu0 %v452
        %487 = vmatpush.msra.mxu0 %v449
        %488 = vmatmul.f32.gmra.mxu0 %v271
        %v489 = vpop.f32.mrf.mxu0
        %v490 = vadd.f32 0.0, %v489
        %491 = vmatmul.f32.gmra.mxu0 %v274
        %v492 = vpop.f32.mrf.mxu0
        %v493 = vadd.f32 0.0, %v492
        %494 = vmatmul.f32.gmra.mxu0 %v277
        %v495 = vpop.f32.mrf.mxu0
        %v496 = vadd.f32 0.0, %v495
        %497 = vmatmul.f32.gmra.mxu0 %v280
        %v498 = vpop.f32.mrf.mxu0
        %v499 = vadd.f32 0.0, %v498
        %500 = vmatmul.f32.gmra.mxu0 %v283
        %v501 = vpop.f32.mrf.mxu0
        %v502 = vadd.f32 0.0, %v501
        %503 = vmatmul.f32.gmra.mxu0 %v286
        %v504 = vpop.f32.mrf.mxu0
        %v505 = vadd.f32 0.0, %v504
        %506 = vmatmul.f32.gmra.mxu0 %v289
        %v507 = vpop.f32.mrf.mxu0
        %v508 = vadd.f32 0.0, %v507
        %509 = vmatmul.f32.gmra.mxu0 %v292
        %v510 = vpop.f32.mrf.mxu0
        %v511 = vadd.f32 0.0, %v510
        %512 = vmatmul.f32.gmra.mxu0 %v295
        %v513 = vpop.f32.mrf.mxu0
        %v514 = vadd.f32 0.0, %v513
        %515 = vmatmul.f32.gmra.mxu0 %v298
        %v516 = vpop.f32.mrf.mxu0
        %v517 = vadd.f32 0.0, %v516
        %518 = vmatmul.f32.gmra.mxu0 %v301
        %v519 = vpop.f32.mrf.mxu0
        %v520 = vadd.f32 0.0, %v519
        %521 = vmatmul.f32.gmra.mxu0 %v304
        %v522 = vpop.f32.mrf.mxu0
        %v523 = vadd.f32 0.0, %v522
        %524 = vmatmul.f32.gmra.mxu0 %v307
        %v525 = vpop.f32.mrf.mxu0
        %v526 = vadd.f32 0.0, %v525
        %527 = vmatmul.f32.gmra.mxu0 %v310
        %v528 = vpop.f32.mrf.mxu0
        %v529 = vadd.f32 0.0, %v528
        %530 = vmatmul.f32.gmra.mxu0 %v313
        %v531 = vpop.f32.mrf.mxu0
        %v532 = vadd.f32 0.0, %v531
        %533 = vmatmul.f32.gmra.mxu0 %v316
        %v534 = vpop.f32.mrf.mxu0
        %v535 = vadd.f32 0.0, %v534
        %536 = vdwg.mxu0
        %537 = vst [vmem:[%s164 + $0x80] sm:$0xff] %v490
        %538 = vst [vmem:[%s164 + $0x88] sm:$0xff] %v493
        %539 = vst [vmem:[%s164 + $0x90] sm:$0xff] %v496
        %540 = vst [vmem:[%s164 + $0x98] sm:$0xff] %v499
        %541 = vst [vmem:[%s164 + $0xa0] sm:$0xff] %v502
        %542 = vst [vmem:[%s164 + $0xa8] sm:$0xff] %v505
        %543 = vst [vmem:[%s164 + $0xb0] sm:$0xff] %v508
        %544 = vst [vmem:[%s164 + $0xb8] sm:$0xff] %v511
        %545 = vst [vmem:[%s164 + $0xc0] sm:$0xff] %v514
        %546 = vst [vmem:[%s164 + $0xc8] sm:$0xff] %v517
        %547 = vst [vmem:[%s164 + $0xd0] sm:$0xff] %v520
        %548 = vst [vmem:[%s164 + $0xd8] sm:$0xff] %v523
        %549 = vst [vmem:[%s164 + $0xe0] sm:$0xff] %v526
        %550 = vst [vmem:[%s164 + $0xe8] sm:$0xff] %v529
        %551 = vst [vmem:[%s164 + $0xf0] sm:$0xff] %v532
        %552 = vst [vmem:[%s164 + $0xf8] sm:$0xff] %v535
        %s553 = sand.u32 %s93, 1
        %s554 = scalar_lea.sflag [#allocation3], %s553
        %s555 = sand.u32 %s93, 1
        %s556 = smul.addr %s555, 256
        %s557 = scalar_lea.vmem [#allocation2], %s556
        // Predicated region
        $region33: #{tpu_custom_call.1} parent=31 // pred_check
          %p558 = pneg %p103
        $region34: #{tpu_custom_call.1} parent=31 // pred_check_branch
          %560 = sbr.rel (%p558) target = $region36
        $region35: #{tpu_custom_call.1} parent=31 // pred_region
          %s561 = smul.u32 32, %s17
          %563 = vsyncadd %s554, 0
          %s564 = smul.addr %s561, 8
          %s565 = scalar_lea.hbm %s3, %s564
          %s566 = sshll.u32 %s557, 4
          %s567 = int_to_ptr.vmem [resolvable:$true] %s566
          %s568 = sshll.u32 %s565, 4
          %s569 = int_to_ptr.hbm [resolvable:$true] %s568
          %574 = dma.vmem_to_hbm [thread:$0]  %s567, 4096, %s569, %s554, 128, 128, 8
        $region36: #{tpu_custom_call.1} parent=31 // pred_fallthru
          _
      $region32: #{tpu_custom_call.1} parent=5 // pred_fallthru
        _
      %p575 = scmp.le.s32.totalorder 2, %s12
      // Predicated region
      $region37: #{tpu_custom_call.1} parent=5 // pred_check
        %p576 = pneg %p575
      $region38: #{tpu_custom_call.1} parent=5 // pred_check_branch
        %578 = sbr.rel (%p576) target = $region40
      $region39: #{tpu_custom_call.1} parent=5 // pred_region
        %s579 = ssub.s32 %s12, 2
        // Predicated region
        $region41: #{tpu_custom_call.1} parent=39 // pred_check
          %p580 = pneg %p109
        $region42: #{tpu_custom_call.1} parent=39 // pred_check_branch
          %582 = sbr.rel (%p580) target = $region44
        $region43: #{tpu_custom_call.1} parent=39 // pred_region
          %s583 = sand.u32 %s94, 1
          %s584 = scalar_lea.sflag [#allocation3], %s583
          %s585 = sand.u32 %s94, 1
          %s586 = smul.addr %s585, 256
          %s587 = scalar_lea.vmem [#allocation2], %s586
          %589 = dma.done %s584, 4096
        $region44: #{tpu_custom_call.1} parent=39 // pred_fallthru
          _
      $region40: #{tpu_custom_call.1} parent=5 // pred_fallthru
        _
    $region6: #{tpu_custom_call.1} parent=1 // loop_footer
      %s16 = sadd.s32 1, %s12
    $region7: #{tpu_custom_call.1} parent=1 // loop_footer_branch
      %11 = sbr.rel target = $region3
    $region8: #{tpu_custom_call.1} parent=1 // loop_exit
      _
    %590 = vsyncpa [#allocation3], 1
    %s591 = scalar_lea.sflag [#allocation3], 1
    %592 = vsyncpa %s591, 1

</llo_original>
